<compile_context>
chip_gen: v5e
topology: v5e:2x2
jax: 0.10.0
libtpu: 0.0.40
codegen_flags: <defaults>
</compile_context>

<pallas_src>
import jax
import jax.numpy as jnp
from jax.experimental import pallas as pl
from jax.experimental.pallas import tpu as pltpu


_LANES = 128  # 128 consecutive samples per lane-dense row


def _linear_sigmoid_kernel(b_ref, x_ref, sel_ref, o_ref):
    # b_ref:   SMEM (1,)             -- Linear bias
    # x_ref:   VMEM (tile_m, 384)    -- 128 samples x 3 features per row (row-major)
    # sel_ref: VMEM (384, 128)       -- kron(eye(128), w): de-interleave + contract
    # o_ref:   VMEM (tile_m, 128)    -- sigmoid(x @ W^T + b), 128 samples per row
    y = jnp.dot(x_ref[...], sel_ref[...], preferred_element_type=jnp.float32)
    o_ref[...] = jax.nn.sigmoid(y + b_ref[0]).astype(o_ref.dtype)


def custom_model_forward(x, weight, bias, *, tile_m=2048):
    """Forward pass of CustomModel: sigmoid(x @ weight.T + bias).

    x:      (N, 3)  f32
    weight: (1, 3)  f32  (torch.nn.Linear(3, 1).weight layout)
    bias:   (1,)    f32
    returns (N, 1)  f32
    """
    n = x.shape[0]
    if n == 0:
        return jnp.zeros((0, 1), dtype=jnp.float32)

    x = x.astype(jnp.float32)
    weight = jnp.asarray(weight, dtype=jnp.float32).reshape(3, 1)
    bias = jnp.asarray(bias, dtype=jnp.float32).reshape(1)

    # Pad batch only up to a multiple of 128 (lane width), never to tile size.
    padded_n = ((n + _LANES - 1) // _LANES) * _LANES
    if padded_n != n:
        x = jnp.pad(x, ((0, padded_n - n), (0, 0)))

    # Free contiguous reshape: row i holds samples [128*i, 128*(i+1)).
    m = padded_n // _LANES
    x2 = x.reshape(m, 3 * _LANES)

    # Selection/contraction matrix: (x2 @ sel)[i, k] = dot(x[128*i + k, :], w).
    sel = jnp.kron(jnp.eye(_LANES, dtype=jnp.float32), weight)  # (384, 128)

    # Tile sizing: 1.5 KB/row in + 0.5 KB/row out; default 2048 rows ~= 4 MB of
    # HBM traffic per grid step. Clamp for small batches (multiple of 8 sublanes).
    tile_m = max(8, (tile_m // 8) * 8)
    m_ceil8 = ((m + 7) // 8) * 8
    tile_m = min(tile_m, m_ceil8)
    grid = (pl.cdiv(m, tile_m),)

    out2 = pl.pallas_call(
        _linear_sigmoid_kernel,
        out_shape=jax.ShapeDtypeStruct((m, _LANES), jnp.float32),
        grid=grid,
        in_specs=[
            # Bias: one scalar -> SMEM, no VMEM tile / DMA pipeline.
            pl.BlockSpec(memory_space=pltpu.MemorySpace.SMEM),
            # Input: lane-dense (tile_m, 384) tiles, auto double-buffered.
            pl.BlockSpec((tile_m, 3 * _LANES), lambda i: (i, 0)),
            # Selection matrix: constant index_map -> resident across the grid.
            pl.BlockSpec((3 * _LANES, _LANES), lambda i: (0, 0)),
        ],
        out_specs=pl.BlockSpec((tile_m, _LANES), lambda i: (i, 0)),
        compiler_params=pltpu.CompilerParams(
            dimension_semantics=("parallel",),
            vmem_limit_bytes=32 * 1024 * 1024,
        ),
    )(bias, x2, sel)

    # Free reshape back to PyTorch's (N, 1) layout; drop the <=127 pad rows.
    out = out2.reshape(padded_n, 1)
    if padded_n != n:
        out = out[:n]
    return out


if __name__ == "__main__":
    key = jax.random.PRNGKey(0)
    kx, kw, kb = jax.random.split(key, 3)

    # Small shapes consistent with nn.Linear(3, 1): x is (batch, 3).
    batch = 8
    x = jax.random.normal(kx, (batch, 3), dtype=jnp.float32)
    # PyTorch default init is U(-1/sqrt(in), 1/sqrt(in)).
    bound = 1.0 / jnp.sqrt(3.0)
    weight = jax.random.uniform(kw, (1, 3), minval=-bound, maxval=bound, dtype=jnp.float32)
    bias = jax.random.uniform(kb, (1,), minval=-bound, maxval=bound, dtype=jnp.float32)

    out = jax.block_until_ready(custom_model_forward(x, weight, bias))
    ref = jax.nn.sigmoid(x @ weight.T + bias)
    assert out.shape == (batch, 1)
    assert jnp.allclose(out, ref, atol=1e-5), "mismatch vs reference (batch=8)"

    # Non-multiple-of-128 batch (ragged lane tile).
    batch2 = 200
    x2 = jax.random.normal(jax.random.PRNGKey(1), (batch2, 3), dtype=jnp.float32)
    out2 = jax.block_until_ready(custom_model_forward(x2, weight, bias))
    ref2 = jax.nn.sigmoid(x2 @ weight.T + bias)
    assert out2.shape == (batch2, 1)
    assert jnp.allclose(out2, ref2, atol=1e-5), "mismatch vs reference (batch=200)"

    # Multi-step grid with a ragged last block (small tile_m to force >1 step).
    batch3 = 2500
    x3 = jax.random.normal(jax.random.PRNGKey(2), (batch3, 3), dtype=jnp.float32)
    out3 = jax.block_until_ready(custom_model_forward(x3, weight, bias, tile_m=16))
    ref3 = jax.nn.sigmoid(x3 @ weight.T + bias)
    assert out3.shape == (batch3, 1)
    assert jnp.allclose(out3, ref3, atol=1e-5), "mismatch vs reference (batch=2500)"

    print("KERNEL_OK")
</pallas_src>

<mosaic_0001>
module attributes {stable_mosaic.version = 11 : i64} {
  func.func @_linear_sigmoid_kernel(%arg0: i32, %arg1: memref<1xf32, #tpu.memory_space<smem>>, %arg2: memref<8x384xf32, #tpu.memory_space<vmem>>, %arg3: memref<384x128xf32, #tpu.memory_space<vmem>>, %arg4: memref<8x128xf32, #tpu.memory_space<vmem>>) attributes {dimension_semantics = [#tpu.dimension_semantics<parallel>], iteration_bounds = array<i64: 1>, scalar_prefetch = 0 : i64, scratch_operands = 0 : i64, tpu.core_type = #tpu.core_type<tc>, window_params = [{transform_indices = @transform_0, window_bounds = array<i64: 1>}, {transform_indices = @transform_1, window_bounds = array<i64: 8, 384>}, {pipeline_mode = #tpu.pipeline_mode<synchronous>, transform_indices = @transform_2, window_bounds = array<i64: 384, 128>}, {transform_indices = @transform_3, window_bounds = array<i64: 8, 128>}]} {
    %c0 = arith.constant 0 : index
    %c0_0 = arith.constant 0 : index
    %0 = vector.load %arg2[%c0, %c0_0] : memref<8x384xf32, #tpu.memory_space<vmem>>, vector<8x384xf32>
    %c0_1 = arith.constant 0 : index
    %c0_2 = arith.constant 0 : index
    %1 = vector.load %arg3[%c0_1, %c0_2] : memref<384x128xf32, #tpu.memory_space<vmem>>, vector<384x128xf32>
    %cst = arith.constant dense<0.000000e+00> : vector<8x128xf32>
    %2 = tpu.matmul %0, %1, %cst {dimension_numbers = #tpu.dot_dimension_numbers<[1], [0], [0], [1], [0, 0, 1, 1], [], []>} : vector<8x384xf32>, vector<384x128xf32>, vector<8x128xf32> -> vector<8x128xf32>
    %c0_3 = arith.constant 0 : index
    %3 = memref.load %arg1[%c0_3] : memref<1xf32, #tpu.memory_space<smem>>
    %4 = vector.broadcast %3 : f32 to vector<8x128xf32>
    %5 = arith.addf %2, %4 : vector<8x128xf32>
    %6 = arith.negf %5 : vector<8x128xf32>
    %7 = math.exp %6 : vector<8x128xf32>
    %cst_4 = arith.constant 1.000000e+00 : f32
    %8 = vector.broadcast %cst_4 : f32 to vector<8x128xf32>
    %9 = arith.addf %8, %7 : vector<8x128xf32>
    %10 = arith.divf %8, %9 : vector<8x128xf32>
    %c0_5 = arith.constant 0 : index
    %c0_6 = arith.constant 0 : index
    %11 = vector.load %arg4[%c0_5, %c0_6] : memref<8x128xf32, #tpu.memory_space<vmem>>, vector<8x128xf32>
    tpu.vector_store %arg4[%c0_5, %c0_6], %10 {strides = array<i32>} : memref<8x128xf32, #tpu.memory_space<vmem>>, vector<8x128xf32>,
    return
  }
  func.func @transform_0(%arg0: i32) -> i32 {
    %c0_i32 = arith.constant 0 : i32
    %c0_i32_0 = arith.constant 0 : i32
    return %c0_i32 : i32
  }
  func.func @transform_1(%arg0: i32) -> (i32, i32) {
    %c0_i32 = arith.constant 0 : i32
    %c0_i32_0 = arith.constant 0 : i32
    return %arg0, %c0_i32 : i32, i32
  }
  func.func @transform_2(%arg0: i32) -> (i32, i32) {
    %c0_i32 = arith.constant 0 : i32
    %c0_i32_0 = arith.constant 0 : i32
    %c0_i32_1 = arith.constant 0 : i32
    return %c0_i32, %c0_i32_0 : i32, i32
  }
  func.func @transform_3(%arg0: i32) -> (i32, i32) {
    %c0_i32 = arith.constant 0 : i32
    %c0_i32_0 = arith.constant 0 : i32
    return %arg0, %c0_i32 : i32, i32
  }
}

</mosaic_0001>

<llo_original>
// kernel: tpu_custom_call.1
$region0: #{tpu_custom_call.1}
  #allocation0 [shape = 'u32[]', space=smem, size = 0x4, offset = 0x4, fixed_abs, tag = 'smem constant byte address 0x4 - core index']
  #allocation1 [shape = 'u32[72,128]{1,0:T(1,128)}', space=vmem, size = 0x9000, scoped, tag = 'internal scratch']
  #allocation2 [shape = 'f32[1]{0:T(128)S(6)}', space=smem, size = 0x200, scoped, tag = 'scoped memory for tpu_custom_call.1']
  %s0 = inlined_call_operand.<no memory space> [shape: f32[1], index: 0, kind: input, shape index: {}]
  %s1 = inlined_call_operand.hbm [shape: f32[1,384], index: 1, kind: input, shape index: {}]
  %s2 = inlined_call_operand.hbm [shape: f32[384,128], index: 2, kind: input, shape index: {}]
  %s3 = inlined_call_operand.hbm [shape: f32[1,128], index: 3, kind: output, shape index: {}]
  %s4 = sld [smem:[#allocation0]]
  $region30: #{tpu_custom_call.1} parent=0
    _
  %s6 = ssub.s32 1, %s4
  %s7 = scalar_select 0, %s6, %s4
  %8 = sst [smem:[#allocation2]] %s0
  $region1: #{tpu_custom_call.1} parent=0
    #allocation3 [shape = 'u8[12288]{0}', space=vmem, size = 0x3000, scoped, tag = 'input window, operand 1, single buffered']
    #allocation4 [shape = 's32[1]{0}', space=sflag, size = 0x4, scoped, tag = 'scoped memory for tpu_custom_call.1']
    #allocation5 [shape = 's32[1]{0}', space=sflag, size = 0x4, scoped, tag = 'scoped memory for tpu_custom_call.1']
    #allocation6 [shape = 'u8[196608]{0}', space=vmem, size = 0x30000, scoped, tag = 'input window, operand 2, single buffered']
    #allocation7 [shape = 's32[1]{0}', space=sflag, size = 0x4, scoped, tag = 'scoped memory for tpu_custom_call.1']
    #allocation8 [shape = 'u8[4096]{0}', space=vmem, size = 0x1000, scoped, tag = 'output window, operand 0, single buffered']
    %9 = vsyncpa [#allocation4], 0
    %10 = vsyncpa [#allocation7], 0
    %11 = vsyncpa [#allocation5], 0
    // Predicated region
    $region2: #{tpu_custom_call.1} parent=1 // pred_check
      _
    $region3: #{tpu_custom_call.1} parent=1 // pred_check_branch
      %13 = sbr.rel (0) target = $region5
    $region4: #{tpu_custom_call.1} parent=1 // pred_region
      _
    $region5: #{tpu_custom_call.1} parent=1 // pred_fallthru
      _
    // Predicated region
    $region6: #{tpu_custom_call.1} parent=1 // pred_check
      _
    $region7: #{tpu_custom_call.1} parent=1 // pred_check_branch
      %15 = sbr.rel (0) target = $region9
    $region8: #{tpu_custom_call.1} parent=1 // pred_region
      %17 = vsyncadd [#allocation4], 336
      %s18 = sshll.u32 %s1, 4
      %s19 = int_to_ptr.hbm [resolvable:$true] %s18
      %s20 = sshll.u32 [#allocation3], 4
      %s21 = int_to_ptr.vmem [resolvable:$true] %s20
      %26 = dma.hbm_to_vmem [thread:$0]  %s19, 48, %s21, [#allocation4], 48, 48, 3
    $region9: #{tpu_custom_call.1} parent=1 // pred_fallthru
      _
    // Predicated region
    $region10: #{tpu_custom_call.1} parent=1 // pred_check
      _
    $region11: #{tpu_custom_call.1} parent=1 // pred_check_branch
      %28 = sbr.rel (0) target = $region13
    $region12: #{tpu_custom_call.1} parent=1 // pred_region
      %30 = vsyncadd [#allocation7], 0
      %s31 = sshll.u32 %s2, 4
      %s32 = int_to_ptr.hbm [resolvable:$true] %s31
      %s33 = sshll.u32 [#allocation6], 4
      %s34 = int_to_ptr.vmem [resolvable:$true] %s33
      %39 = dma.hbm_to_vmem [thread:$0]  %s32, 6144, %s34, [#allocation7], 128, 128, 8
    $region13: #{tpu_custom_call.1} parent=1 // pred_fallthru
      _
    // Predicated region
    $region14: #{tpu_custom_call.1} parent=1 // pred_check
      _
    $region15: #{tpu_custom_call.1} parent=1 // pred_check_branch
      %41 = sbr.rel (0) target = $region17
    $region16: #{tpu_custom_call.1} parent=1 // pred_region
      %43 = dma.done [#allocation4], 384
    $region17: #{tpu_custom_call.1} parent=1 // pred_fallthru
      _
    // Predicated region
    $region18: #{tpu_custom_call.1} parent=1 // pred_check
      _
    $region19: #{tpu_custom_call.1} parent=1 // pred_check_branch
      %45 = sbr.rel (0) target = $region21
    $region20: #{tpu_custom_call.1} parent=1 // pred_region
      %47 = dma.done [#allocation7], 6144
    $region21: #{tpu_custom_call.1} parent=1 // pred_fallthru
      _
    %v48 = vld [vmem:[#allocation3] sm:$0x7]
    %v49 = vld [vmem:[#allocation3 + $0x3] sm:$0x7]
    %v50 = vld [vmem:[#allocation3 + $0x6] sm:$0x7]
    %v51 = vld [vmem:[#allocation3 + $0x9] sm:$0x7]
    %v52 = vld [vmem:[#allocation3 + $0xc] sm:$0x7]
    %v53 = vld [vmem:[#allocation3 + $0xf] sm:$0x7]
    %v54 = vld [vmem:[#allocation3 + $0x12] sm:$0x7]
    %v55 = vld [vmem:[#allocation3 + $0x15] sm:$0x7]
    %v56 = vld [vmem:[#allocation6] sm:$0xff]
    %v57 = vld [vmem:[#allocation6 + $0x8] sm:$0xff]
    %v58 = vld [vmem:[#allocation6 + $0x10] sm:$0xff]
    %v59 = vld [vmem:[#allocation6 + $0x18] sm:$0xff]
    %v60 = vld [vmem:[#allocation6 + $0x20] sm:$0xff]
    %v61 = vld [vmem:[#allocation6 + $0x28] sm:$0xff]
    %v62 = vld [vmem:[#allocation6 + $0x30] sm:$0xff]
    %v63 = vld [vmem:[#allocation6 + $0x38] sm:$0xff]
    %v64 = vld [vmem:[#allocation6 + $0x40] sm:$0xff]
    %v65 = vld [vmem:[#allocation6 + $0x48] sm:$0xff]
    %v66 = vld [vmem:[#allocation6 + $0x50] sm:$0xff]
    %v67 = vld [vmem:[#allocation6 + $0x58] sm:$0xff]
    %v68 = vld [vmem:[#allocation6 + $0x60] sm:$0xff]
    %v69 = vld [vmem:[#allocation6 + $0x68] sm:$0xff]
    %v70 = vld [vmem:[#allocation6 + $0x70] sm:$0xff]
    %v71 = vld [vmem:[#allocation6 + $0x78] sm:$0xff]
    %v72 = vld [vmem:[#allocation6 + $0x80] sm:$0xff]
    %v73 = vld [vmem:[#allocation6 + $0x88] sm:$0xff]
    %v74 = vld [vmem:[#allocation6 + $0x90] sm:$0xff]
    %v75 = vld [vmem:[#allocation6 + $0x98] sm:$0xff]
    %v76 = vld [vmem:[#allocation6 + $0xa0] sm:$0xff]
    %v77 = vld [vmem:[#allocation6 + $0xa8] sm:$0xff]
    %v78 = vld [vmem:[#allocation6 + $0xb0] sm:$0xff]
    %v79 = vld [vmem:[#allocation6 + $0xb8] sm:$0xff]
    %v80 = vld [vmem:[#allocation6 + $0xc0] sm:$0xff]
    %v81 = vld [vmem:[#allocation6 + $0xc8] sm:$0xff]
    %v82 = vld [vmem:[#allocation6 + $0xd0] sm:$0xff]
    %v83 = vld [vmem:[#allocation6 + $0xd8] sm:$0xff]
    %v84 = vld [vmem:[#allocation6 + $0xe0] sm:$0xff]
    %v85 = vld [vmem:[#allocation6 + $0xe8] sm:$0xff]
    %v86 = vld [vmem:[#allocation6 + $0xf0] sm:$0xff]
    %v87 = vld [vmem:[#allocation6 + $0xf8] sm:$0xff]
    %v88 = vld [vmem:[#allocation6 + $0x100] sm:$0xff]
    %v89 = vld [vmem:[#allocation6 + $0x108] sm:$0xff]
    %v90 = vld [vmem:[#allocation6 + $0x110] sm:$0xff]
    %v91 = vld [vmem:[#allocation6 + $0x118] sm:$0xff]
    %v92 = vld [vmem:[#allocation6 + $0x120] sm:$0xff]
    %v93 = vld [vmem:[#allocation6 + $0x128] sm:$0xff]
    %v94 = vld [vmem:[#allocation6 + $0x130] sm:$0xff]
    %v95 = vld [vmem:[#allocation6 + $0x138] sm:$0xff]
    %v96 = vld [vmem:[#allocation6 + $0x140] sm:$0xff]
    %v97 = vld [vmem:[#allocation6 + $0x148] sm:$0xff]
    %v98 = vld [vmem:[#allocation6 + $0x150] sm:$0xff]
    %v99 = vld [vmem:[#allocation6 + $0x158] sm:$0xff]
    %v100 = vld [vmem:[#allocation6 + $0x160] sm:$0xff]
    %v101 = vld [vmem:[#allocation6 + $0x168] sm:$0xff]
    %v102 = vld [vmem:[#allocation6 + $0x170] sm:$0xff]
    %v103 = vld [vmem:[#allocation6 + $0x178] sm:$0xff]
    %s104 = sld [smem:[#allocation2]]
    %v105 = vstv %s104
    %114 = vst [vmem:[#allocation1] ss:$9 sm:$0xff] %v48
    %s115 = scalar_lea.vmem [#allocation1], 1
    %116 = vst [vmem:[%s115] ss:$9 sm:$0xff] %v49
    %s117 = scalar_lea.vmem [#allocation1], 2
    %118 = vst [vmem:[%s117] ss:$9 sm:$0xff] %v50
    %s119 = scalar_lea.vmem [#allocation1], 3
    %120 = vst [vmem:[%s119] ss:$9 sm:$0xff] %v51
    %s121 = scalar_lea.vmem [#allocation1], 4
    %122 = vst [vmem:[%s121] ss:$9 sm:$0xff] %v52
    %s123 = scalar_lea.vmem [#allocation1], 5
    %124 = vst [vmem:[%s123] ss:$9 sm:$0xff] %v53
    %s125 = scalar_lea.vmem [#allocation1], 6
    %126 = vst [vmem:[%s125] ss:$9 sm:$0xff] %v54
    %s127 = scalar_lea.vmem [#allocation1], 7
    %128 = vst [vmem:[%s127] ss:$9 sm:$0xff] %v55
    %v129 = vld [vmem:[#allocation1] sm:$0xff]
    %v130 = vld [vmem:[#allocation1 + $0x9] sm:$0xff]
    %v131 = vld [vmem:[#allocation1 + $0x12] sm:$0xff]
    %135 = vmatpush.msra.mxu0 %v71
    %136 = vmatpush.msra.mxu0 %v70
    %137 = vmatpush.msra.mxu0 %v69
    %138 = vmatpush.msra.mxu0 %v68
    %139 = vmatpush.msra.mxu0 %v67
    %140 = vmatpush.msra.mxu0 %v66
    %141 = vmatpush.msra.mxu0 %v65
    %142 = vmatpush.msra.mxu0 %v64
    %143 = vmatpush.msra.mxu0 %v63
    %144 = vmatpush.msra.mxu0 %v62
    %145 = vmatpush.msra.mxu0 %v61
    %146 = vmatpush.msra.mxu0 %v60
    %147 = vmatpush.msra.mxu0 %v59
    %148 = vmatpush.msra.mxu0 %v58
    %149 = vmatpush.msra.mxu0 %v57
    %150 = vmatpush.msra.mxu0 %v56
    %151 = vmatmul.f32.gmra.mxu0 %v129
    %v152 = vpop.f32.mrf.mxu0
    %v153 = vadd.f32 %v105, %v152
    %154 = vdwg.mxu0
    %155 = vmatpush.msra.mxu0 %v87
    %156 = vmatpush.msra.mxu0 %v86
    %157 = vmatpush.msra.mxu0 %v85
    %158 = vmatpush.msra.mxu0 %v84
    %159 = vmatpush.msra.mxu0 %v83
    %160 = vmatpush.msra.mxu0 %v82
    %161 = vmatpush.msra.mxu0 %v81
    %162 = vmatpush.msra.mxu0 %v80
    %163 = vmatpush.msra.mxu0 %v79
    %164 = vmatpush.msra.mxu0 %v78
    %165 = vmatpush.msra.mxu0 %v77
    %166 = vmatpush.msra.mxu0 %v76
    %167 = vmatpush.msra.mxu0 %v75
    %168 = vmatpush.msra.mxu0 %v74
    %169 = vmatpush.msra.mxu0 %v73
    %170 = vmatpush.msra.mxu0 %v72
    %171 = vmatmul.f32.gmra.mxu0 %v130
    %v172 = vpop.f32.mrf.mxu0
    %v173 = vadd.f32 %v153, %v172
    %174 = vdwg.mxu0
    %175 = vmatpush.msra.mxu0 %v103
    %176 = vmatpush.msra.mxu0 %v102
    %177 = vmatpush.msra.mxu0 %v101
    %178 = vmatpush.msra.mxu0 %v100
    %179 = vmatpush.msra.mxu0 %v99
    %180 = vmatpush.msra.mxu0 %v98
    %181 = vmatpush.msra.mxu0 %v97
    %182 = vmatpush.msra.mxu0 %v96
    %183 = vmatpush.msra.mxu0 %v95
    %184 = vmatpush.msra.mxu0 %v94
    %185 = vmatpush.msra.mxu0 %v93
    %186 = vmatpush.msra.mxu0 %v92
    %187 = vmatpush.msra.mxu0 %v91
    %188 = vmatpush.msra.mxu0 %v90
    %189 = vmatpush.msra.mxu0 %v89
    %190 = vmatpush.msra.mxu0 %v88
    %191 = vmatmul.f32.gmra.mxu0 %v131
    %v192 = vpop.f32.mrf.mxu0
    %v193 = vadd.f32 %v173, %v192
    %194 = vdwg.mxu0
    %v195 = vxor.u32 %v193, 2147483648
    %v196 = vmul.f32 %v195, 1.442695
    %v197 = vpow.pop %v196
    %v198 = vadd.f32 %v197, 1.0
    %v199 = vrcp.pop %v198
    %v200 = vmul.f32 %v198, %v199
    %v201 = vsub.f32 1.0, %v200
    %v202 = vmul.f32 %v199, %v201
    %v203 = vadd.f32 %v199, %v202
    %vm204 = vweird.f32 %v198
    %vm205 = vweird.f32 %v199
    %vm206 = vmor %vm204, %vm205
    %v207 = vsel %vm206, %v199, %v203
    %v208 = vand.u32 2147483647, %v198
    %vm209 = vcmp.eq.f32.partialorder %v208, 8.507059e+37
    %v210 = vand.u32 %v198, 2147483648
    %v211 = vor.u32 1.1754944e-38, %v210
    %v212 = vsel %vm209, %v211, %v207
    %v213 = vmul.f32 1.0, %v212
    %214 = vst [vmem:[#allocation8] sm:$0xff] %v213
    // Predicated region
    $region22: #{tpu_custom_call.1} parent=1 // pred_check
      _
    $region23: #{tpu_custom_call.1} parent=1 // pred_check_branch
      %216 = sbr.rel (0) target = $region25
    $region24: #{tpu_custom_call.1} parent=1 // pred_region
      %218 = vsyncadd [#allocation5], 112
      %s219 = sshll.u32 [#allocation8], 4
      %s220 = int_to_ptr.vmem [resolvable:$true] %s219
      %s221 = sshll.u32 %s3, 4
      %s222 = int_to_ptr.hbm [resolvable:$true] %s221
      %227 = dma.vmem_to_hbm [thread:$0]  %s220, 16, %s222, [#allocation5], 16, 16, 1
    $region25: #{tpu_custom_call.1} parent=1 // pred_fallthru
      _
    // Predicated region
    $region26: #{tpu_custom_call.1} parent=1 // pred_check
      _
    $region27: #{tpu_custom_call.1} parent=1 // pred_check_branch
      %229 = sbr.rel (0) target = $region29
    $region28: #{tpu_custom_call.1} parent=1 // pred_region
      %231 = dma.done [#allocation5], 128
    $region29: #{tpu_custom_call.1} parent=1 // pred_fallthru
      _
    %232 = vsyncpa [#allocation4], 1
    %233 = vsyncpa [#allocation7], 1
    %234 = vsyncpa [#allocation5], 1

</llo_original>
